<compile_context>
chip_gen: v5e
topology: v5e:2x2
jax: 0.10.0
libtpu: 0.0.40
codegen_flags: <defaults>
</compile_context>

<pallas_src>
import jax
import jax.numpy as jnp
from jax.experimental import pallas as pl
from jax.experimental.pallas import tpu as pltpu


def _apply_coeffs_kernel(coeff_ref, x_ref, o_ref):
    # coeff_ref: (1, 12, TH, W), x_ref: (1, 3, TH, W), o_ref: (1, 3, TH, W)
    x0 = x_ref[0, 0]
    x1 = x_ref[0, 1]
    x2 = x_ref[0, 2]
    # Direct per-channel-plane stores (no concatenate temporary).
    o_ref[0, 0] = (x0 * coeff_ref[0, 0] + x1 * coeff_ref[0, 1]
                   + x2 * coeff_ref[0, 2] + coeff_ref[0, 9])
    o_ref[0, 1] = (x0 * coeff_ref[0, 3] + x1 * coeff_ref[0, 4]
                   + x2 * coeff_ref[0, 5] + coeff_ref[0, 10])
    o_ref[0, 2] = (x0 * coeff_ref[0, 6] + x1 * coeff_ref[0, 7]
                   + x2 * coeff_ref[0, 8] + coeff_ref[0, 11])


def _choose_tile_h(H, W, dtype_size, vmem_budget_bytes=24 * 1024 * 1024):
    """Largest TH (multiple of 8, dividing H, <=512) whose double-buffered
    working set (coeff + input + output = 18 planes) fits the VMEM budget."""
    if H % 8 != 0:
        # Block must equal the full array dim if it can't be 8-aligned.
        return H
    per_row_bytes = 18 * W * dtype_size * 2  # x2 for double buffering
    max_rows = max(vmem_budget_bytes // per_row_bytes, 1)
    candidates = [th for th in range(8, min(H, 512) + 1, 8)
                  if H % th == 0 and th <= max_rows]
    return max(candidates) if candidates else 8


def apply_coeffs(coeff, full_res_input, tile_h=None):
    """coeff: (N, 12, H, W), full_res_input: (N, 3, H, W) -> (N, 3, H, W)."""
    N, C12, H, W = coeff.shape
    assert C12 == 12, "coeff must have 12 channels"
    Nx, C3, Hx, Wx = full_res_input.shape
    assert (Nx, Hx, Wx) == (N, H, W) and C3 == 3

    dtype_size = jnp.dtype(full_res_input.dtype).itemsize
    TH = tile_h if tile_h is not None else _choose_tile_h(H, W, dtype_size)
    assert H % TH == 0, "tile height must divide H"
    n_h = H // TH

    # Double-buffered per-step bytes: (12 + 3 + 3) planes of (TH, W).
    step_bytes = 18 * TH * W * dtype_size * 2
    vmem_limit = int(min(max(2 * step_bytes, 32 * 1024 * 1024),
                         48 * 1024 * 1024))

    cost = pl.CostEstimate(
        flops=int(N * H * W * 18),                      # 9 mul + 9 add / pixel
        transcendentals=0,
        bytes_accessed=int(N * 18 * H * W * dtype_size),
    )

    grid_spec = pltpu.PrefetchScalarGridSpec(
        num_scalar_prefetch=0,
        grid=(N, n_h),
        in_specs=[
            pl.BlockSpec((1, 12, TH, W), lambda b, h: (b, 0, h, 0)),
            pl.BlockSpec((1, 3, TH, W), lambda b, h: (b, 0, h, 0)),
        ],
        out_specs=pl.BlockSpec((1, 3, TH, W), lambda b, h: (b, 0, h, 0)),
    )

    return pl.pallas_call(
        _apply_coeffs_kernel,
        out_shape=jax.ShapeDtypeStruct((N, 3, H, W), full_res_input.dtype),
        grid_spec=grid_spec,
        compiler_params=pltpu.CompilerParams(
            dimension_semantics=("parallel", "parallel"),
            vmem_limit_bytes=vmem_limit,
        ),
        cost_estimate=cost,
    )(coeff, full_res_input)


def apply_coeffs_ref(coeff, x):
    """Pure-JAX reference mirroring the PyTorch forward."""
    R = jnp.sum(x * coeff[:, 0:3, :, :], axis=1, keepdims=True) + coeff[:, 9:10, :, :]
    G = jnp.sum(x * coeff[:, 3:6, :, :], axis=1, keepdims=True) + coeff[:, 10:11, :, :]
    B = jnp.sum(x * coeff[:, 6:9, :, :], axis=1, keepdims=True) + coeff[:, 11:12, :, :]
    return jnp.concatenate([R, G, B], axis=1)


if __name__ == "__main__":
    key = jax.random.PRNGKey(0)

    # Small toy test (single spatial tile per batch element).
    k1, k2 = jax.random.split(key)
    N, H, W = 2, 16, 16
    coeff = jax.random.normal(k1, (N, 12, H, W), dtype=jnp.float32)
    x = jax.random.normal(k2, (N, 3, H, W), dtype=jnp.float32)

    out = jax.block_until_ready(apply_coeffs(coeff, x))
    ref = apply_coeffs_ref(coeff, x)
    assert out.shape == (N, 3, H, W)
    assert jnp.allclose(out, ref, atol=1e-5, rtol=1e-5)

    # Slightly larger test exercising the spatial-tiled grid (grid = (2, 4)).
    k3, k4 = jax.random.split(k1)
    N2, H2, W2 = 2, 64, 128
    coeff2 = jax.random.normal(k3, (N2, 12, H2, W2), dtype=jnp.float32)
    x2 = jax.random.normal(k4, (N2, 3, H2, W2), dtype=jnp.float32)

    out2 = jax.block_until_ready(apply_coeffs(coeff2, x2, tile_h=16))
    ref2 = apply_coeffs_ref(coeff2, x2)
    assert out2.shape == (N2, 3, H2, W2)
    assert jnp.allclose(out2, ref2, atol=1e-5, rtol=1e-5)

    print("KERNEL_OK")
</pallas_src>

<mosaic_0001>
module attributes {stable_mosaic.version = 11 : i64} {
  func.func @_apply_coeffs_kernel(%arg0: i32, %arg1: i32, %arg2: memref<1x12x16x16xf32, #tpu.memory_space<vmem>>, %arg3: memref<1x3x16x16xf32, #tpu.memory_space<vmem>>, %arg4: memref<1x3x16x16xf32, #tpu.memory_space<vmem>>) attributes {dimension_semantics = [#tpu.dimension_semantics<parallel>, #tpu.dimension_semantics<parallel>], iteration_bounds = array<i64: 2, 1>, scalar_prefetch = 0 : i64, scratch_operands = 0 : i64, tpu.core_type = #tpu.core_type<tc>, window_params = [{transform_indices = @transform_0, window_bounds = array<i64: 1, 12, 16, 16>}, {transform_indices = @transform_1, window_bounds = array<i64: 1, 3, 16, 16>}, {transform_indices = @transform_2, window_bounds = array<i64: 1, 3, 16, 16>}]} {
    %c0 = arith.constant 0 : index
    %c0_0 = arith.constant 0 : index
    %c0_1 = arith.constant 0 : index
    %c0_2 = arith.constant 0 : index
    %0 = vector.load %arg3[%c0, %c0_0, %c0_1, %c0_2] : memref<1x3x16x16xf32, #tpu.memory_space<vmem>>, vector<1x1x16x16xf32>
    %1 = vector.shape_cast %0 : vector<1x1x16x16xf32> to vector<16x16xf32>
    %c0_3 = arith.constant 0 : index
    %c1 = arith.constant 1 : index
    %c0_4 = arith.constant 0 : index
    %c0_5 = arith.constant 0 : index
    %2 = vector.load %arg3[%c0_3, %c1, %c0_4, %c0_5] : memref<1x3x16x16xf32, #tpu.memory_space<vmem>>, vector<1x1x16x16xf32>
    %3 = vector.shape_cast %2 : vector<1x1x16x16xf32> to vector<16x16xf32>
    %c0_6 = arith.constant 0 : index
    %c2 = arith.constant 2 : index
    %c0_7 = arith.constant 0 : index
    %c0_8 = arith.constant 0 : index
    %4 = vector.load %arg3[%c0_6, %c2, %c0_7, %c0_8] : memref<1x3x16x16xf32, #tpu.memory_space<vmem>>, vector<1x1x16x16xf32>
    %5 = vector.shape_cast %4 : vector<1x1x16x16xf32> to vector<16x16xf32>
    %c0_9 = arith.constant 0 : index
    %c0_10 = arith.constant 0 : index
    %c0_11 = arith.constant 0 : index
    %c0_12 = arith.constant 0 : index
    %6 = vector.load %arg2[%c0_9, %c0_10, %c0_11, %c0_12] : memref<1x12x16x16xf32, #tpu.memory_space<vmem>>, vector<1x1x16x16xf32>
    %7 = vector.shape_cast %6 : vector<1x1x16x16xf32> to vector<16x16xf32>
    %8 = arith.mulf %1, %7 : vector<16x16xf32>
    %c0_13 = arith.constant 0 : index
    %c1_14 = arith.constant 1 : index
    %c0_15 = arith.constant 0 : index
    %c0_16 = arith.constant 0 : index
    %9 = vector.load %arg2[%c0_13, %c1_14, %c0_15, %c0_16] : memref<1x12x16x16xf32, #tpu.memory_space<vmem>>, vector<1x1x16x16xf32>
    %10 = vector.shape_cast %9 : vector<1x1x16x16xf32> to vector<16x16xf32>
    %11 = arith.mulf %3, %10 : vector<16x16xf32>
    %12 = arith.addf %8, %11 : vector<16x16xf32>
    %c0_17 = arith.constant 0 : index
    %c2_18 = arith.constant 2 : index
    %c0_19 = arith.constant 0 : index
    %c0_20 = arith.constant 0 : index
    %13 = vector.load %arg2[%c0_17, %c2_18, %c0_19, %c0_20] : memref<1x12x16x16xf32, #tpu.memory_space<vmem>>, vector<1x1x16x16xf32>
    %14 = vector.shape_cast %13 : vector<1x1x16x16xf32> to vector<16x16xf32>
    %15 = arith.mulf %5, %14 : vector<16x16xf32>
    %16 = arith.addf %12, %15 : vector<16x16xf32>
    %c0_21 = arith.constant 0 : index
    %c9 = arith.constant 9 : index
    %c0_22 = arith.constant 0 : index
    %c0_23 = arith.constant 0 : index
    %17 = vector.load %arg2[%c0_21, %c9, %c0_22, %c0_23] : memref<1x12x16x16xf32, #tpu.memory_space<vmem>>, vector<1x1x16x16xf32>
    %18 = vector.shape_cast %17 : vector<1x1x16x16xf32> to vector<16x16xf32>
    %19 = arith.addf %16, %18 : vector<16x16xf32>
    %c0_24 = arith.constant 0 : index
    %c0_25 = arith.constant 0 : index
    %c0_26 = arith.constant 0 : index
    %c0_27 = arith.constant 0 : index
    %20 = vector.load %arg4[%c0_24, %c0_25, %c0_26, %c0_27] : memref<1x3x16x16xf32, #tpu.memory_space<vmem>>, vector<1x1x16x16xf32>
    %21 = vector.shape_cast %20 : vector<1x1x16x16xf32> to vector<16x16xf32>
    %22 = vector.shape_cast %19 : vector<16x16xf32> to vector<1x1x16x16xf32>
    tpu.vector_store %arg4[%c0_24, %c0_25, %c0_26, %c0_27], %22 {strides = array<i32>} : memref<1x3x16x16xf32, #tpu.memory_space<vmem>>, vector<1x1x16x16xf32>,
    %c0_28 = arith.constant 0 : index
    %c3 = arith.constant 3 : index
    %c0_29 = arith.constant 0 : index
    %c0_30 = arith.constant 0 : index
    %23 = vector.load %arg2[%c0_28, %c3, %c0_29, %c0_30] : memref<1x12x16x16xf32, #tpu.memory_space<vmem>>, vector<1x1x16x16xf32>
    %24 = vector.shape_cast %23 : vector<1x1x16x16xf32> to vector<16x16xf32>
    %25 = arith.mulf %1, %24 : vector<16x16xf32>
    %c0_31 = arith.constant 0 : index
    %c4 = arith.constant 4 : index
    %c0_32 = arith.constant 0 : index
    %c0_33 = arith.constant 0 : index
    %26 = vector.load %arg2[%c0_31, %c4, %c0_32, %c0_33] : memref<1x12x16x16xf32, #tpu.memory_space<vmem>>, vector<1x1x16x16xf32>
    %27 = vector.shape_cast %26 : vector<1x1x16x16xf32> to vector<16x16xf32>
    %28 = arith.mulf %3, %27 : vector<16x16xf32>
    %29 = arith.addf %25, %28 : vector<16x16xf32>
    %c0_34 = arith.constant 0 : index
    %c5 = arith.constant 5 : index
    %c0_35 = arith.constant 0 : index
    %c0_36 = arith.constant 0 : index
    %30 = vector.load %arg2[%c0_34, %c5, %c0_35, %c0_36] : memref<1x12x16x16xf32, #tpu.memory_space<vmem>>, vector<1x1x16x16xf32>
    %31 = vector.shape_cast %30 : vector<1x1x16x16xf32> to vector<16x16xf32>
    %32 = arith.mulf %5, %31 : vector<16x16xf32>
    %33 = arith.addf %29, %32 : vector<16x16xf32>
    %c0_37 = arith.constant 0 : index
    %c10 = arith.constant 10 : index
    %c0_38 = arith.constant 0 : index
    %c0_39 = arith.constant 0 : index
    %34 = vector.load %arg2[%c0_37, %c10, %c0_38, %c0_39] : memref<1x12x16x16xf32, #tpu.memory_space<vmem>>, vector<1x1x16x16xf32>
    %35 = vector.shape_cast %34 : vector<1x1x16x16xf32> to vector<16x16xf32>
    %36 = arith.addf %33, %35 : vector<16x16xf32>
    %c0_40 = arith.constant 0 : index
    %c1_41 = arith.constant 1 : index
    %c0_42 = arith.constant 0 : index
    %c0_43 = arith.constant 0 : index
    %37 = vector.load %arg4[%c0_40, %c1_41, %c0_42, %c0_43] : memref<1x3x16x16xf32, #tpu.memory_space<vmem>>, vector<1x1x16x16xf32>
    %38 = vector.shape_cast %37 : vector<1x1x16x16xf32> to vector<16x16xf32>
    %39 = vector.shape_cast %36 : vector<16x16xf32> to vector<1x1x16x16xf32>
    tpu.vector_store %arg4[%c0_40, %c1_41, %c0_42, %c0_43], %39 {strides = array<i32>} : memref<1x3x16x16xf32, #tpu.memory_space<vmem>>, vector<1x1x16x16xf32>,
    %c0_44 = arith.constant 0 : index
    %c6 = arith.constant 6 : index
    %c0_45 = arith.constant 0 : index
    %c0_46 = arith.constant 0 : index
    %40 = vector.load %arg2[%c0_44, %c6, %c0_45, %c0_46] : memref<1x12x16x16xf32, #tpu.memory_space<vmem>>, vector<1x1x16x16xf32>
    %41 = vector.shape_cast %40 : vector<1x1x16x16xf32> to vector<16x16xf32>
    %42 = arith.mulf %1, %41 : vector<16x16xf32>
    %c0_47 = arith.constant 0 : index
    %c7 = arith.constant 7 : index
    %c0_48 = arith.constant 0 : index
    %c0_49 = arith.constant 0 : index
    %43 = vector.load %arg2[%c0_47, %c7, %c0_48, %c0_49] : memref<1x12x16x16xf32, #tpu.memory_space<vmem>>, vector<1x1x16x16xf32>
    %44 = vector.shape_cast %43 : vector<1x1x16x16xf32> to vector<16x16xf32>
    %45 = arith.mulf %3, %44 : vector<16x16xf32>
    %46 = arith.addf %42, %45 : vector<16x16xf32>
    %c0_50 = arith.constant 0 : index
    %c8 = arith.constant 8 : index
    %c0_51 = arith.constant 0 : index
    %c0_52 = arith.constant 0 : index
    %47 = vector.load %arg2[%c0_50, %c8, %c0_51, %c0_52] : memref<1x12x16x16xf32, #tpu.memory_space<vmem>>, vector<1x1x16x16xf32>
    %48 = vector.shape_cast %47 : vector<1x1x16x16xf32> to vector<16x16xf32>
    %49 = arith.mulf %5, %48 : vector<16x16xf32>
    %50 = arith.addf %46, %49 : vector<16x16xf32>
    %c0_53 = arith.constant 0 : index
    %c11 = arith.constant 11 : index
    %c0_54 = arith.constant 0 : index
    %c0_55 = arith.constant 0 : index
    %51 = vector.load %arg2[%c0_53, %c11, %c0_54, %c0_55] : memref<1x12x16x16xf32, #tpu.memory_space<vmem>>, vector<1x1x16x16xf32>
    %52 = vector.shape_cast %51 : vector<1x1x16x16xf32> to vector<16x16xf32>
    %53 = arith.addf %50, %52 : vector<16x16xf32>
    %c0_56 = arith.constant 0 : index
    %c2_57 = arith.constant 2 : index
    %c0_58 = arith.constant 0 : index
    %c0_59 = arith.constant 0 : index
    %54 = vector.load %arg4[%c0_56, %c2_57, %c0_58, %c0_59] : memref<1x3x16x16xf32, #tpu.memory_space<vmem>>, vector<1x1x16x16xf32>
    %55 = vector.shape_cast %54 : vector<1x1x16x16xf32> to vector<16x16xf32>
    %56 = vector.shape_cast %53 : vector<16x16xf32> to vector<1x1x16x16xf32>
    tpu.vector_store %arg4[%c0_56, %c2_57, %c0_58, %c0_59], %56 {strides = array<i32>} : memref<1x3x16x16xf32, #tpu.memory_space<vmem>>, vector<1x1x16x16xf32>,
    return
  }
  func.func @transform_0(%arg0: i32, %arg1: i32) -> (i32, i32, i32, i32) {
    %c0_i32 = arith.constant 0 : i32
    %c0_i32_0 = arith.constant 0 : i32
    %c0_i32_1 = arith.constant 0 : i32
    return %arg0, %c0_i32, %arg1, %c0_i32_0 : i32, i32, i32, i32
  }
  func.func @transform_1(%arg0: i32, %arg1: i32) -> (i32, i32, i32, i32) {
    %c0_i32 = arith.constant 0 : i32
    %c0_i32_0 = arith.constant 0 : i32
    %c0_i32_1 = arith.constant 0 : i32
    return %arg0, %c0_i32, %arg1, %c0_i32_0 : i32, i32, i32, i32
  }
  func.func @transform_2(%arg0: i32, %arg1: i32) -> (i32, i32, i32, i32) {
    %c0_i32 = arith.constant 0 : i32
    %c0_i32_0 = arith.constant 0 : i32
    %c0_i32_1 = arith.constant 0 : i32
    return %arg0, %c0_i32, %arg1, %c0_i32_0 : i32, i32, i32, i32
  }
}

</mosaic_0001>

<llo_original>
// kernel: tpu_custom_call.1
$region0: #{tpu_custom_call.1}
  #allocation0 [shape = 'u32[]', space=smem, size = 0x4, offset = 0x4, fixed_abs, tag = 'smem constant byte address 0x4 - core index']
  #allocation1 [shape = 'u32[72,128]{1,0:T(1,128)}', space=vmem, size = 0x9000, scoped, tag = 'internal scratch']
  %s0 = inlined_call_operand.hbm [shape: f32[2,12,16,16], index: 0, kind: input, shape index: {}]
  %s1 = inlined_call_operand.hbm [shape: f32[2,3,16,16], index: 1, kind: input, shape index: {}]
  %s2 = inlined_call_operand.hbm [shape: f32[2,3,16,16], index: 2, kind: output, shape index: {}]
  %s3 = sld [smem:[#allocation0]]
  $region49: #{tpu_custom_call.1} parent=0
    _
  %s5 = ssub.s32 1, %s3
  %s6 = scalar_select 0, %s5, %s3
  $region1: #{tpu_custom_call.1} parent=0
    #allocation2 [shape = 'u8[196608]{0}', space=vmem, size = 0x30000, scoped, tag = 'input window, operand 0']
    #allocation3 [shape = 's32[2]{0}', space=sflag, size = 0x8, scoped, tag = 'scoped memory for tpu_custom_call.1']
    #allocation4 [shape = 's32[2]{0}', space=sflag, size = 0x8, scoped, tag = 'scoped memory for tpu_custom_call.1']
    #allocation5 [shape = 'u8[49152]{0}', space=vmem, size = 0xc000, scoped, tag = 'input window, operand 1']
    #allocation6 [shape = 's32[2]{0}', space=sflag, size = 0x8, scoped, tag = 'scoped memory for tpu_custom_call.1']
    #allocation7 [shape = 'u8[49152]{0}', space=vmem, size = 0xc000, scoped, tag = 'output window, operand 0']
    %7 = vsyncpa [#allocation3], 0
    %s8 = scalar_lea.sflag [#allocation3], 1
    %9 = vsyncpa %s8, 0
    %10 = vsyncpa [#allocation6], 0
    %s11 = scalar_lea.sflag [#allocation6], 1
    %12 = vsyncpa %s11, 0
    %13 = vsyncpa [#allocation4], 0
    %s14 = scalar_lea.sflag [#allocation4], 1
    %15 = vsyncpa %s14, 0
    loop: start=0, step=1, limit=4
    $region2: #{tpu_custom_call.1} parent=1 // loop_pre_header
      _
    $region3: #{tpu_custom_call.1} parent=1 // loop_header
      %s17 = sphi 0, %s21
      %p18 = scmp.ge.s32.totalorder %s17, 4
      %s24 = sphi 0, %s36
      %s25 = sphi 0, %s32
      %s26 = sphi 0, %s24
      %s27 = sphi 0, %s25
      %s28 = sphi 0, %s26
      %s29 = sphi 0, %s27
      %s41 = sphi 0, %s43
      %s44 = sphi 0, %s41
      %s45 = sphi 0, %s44
      %s61 = sphi 0, %s45
      %s69 = sphi 0, %s71
      %s72 = sphi 0, %s69
      %s73 = sphi 0, %s72
      %s89 = sphi 0, %s73
      %s97 = sphi 0, %s99
      %s100 = sphi 0, %s97
      %s101 = sphi 0, %s100
      %s117 = sphi 0, %s101
    $region4: #{tpu_custom_call.1} parent=1 // loop_header_branch
      %20 = sbr.rel (%p18) target = $region8
    $region5: #{tpu_custom_call.1} parent=1 // loop_body
      %s22 = ssub.s32 %s17, 1
      %s23 = ssub.s32 %s17, 2
      %s30 = sadd.s32 1, %s25
      %p31 = scmp.ge.s32.totalorder %s30, 1
      %s32 = scalar_select %p31, 0, %s30
      %s33 = sadd.s32 1, %s24
      %s34 = scalar_select %p31, %s33, %s24
      %p35 = scmp.ge.s32.totalorder %s34, 2
      %s36 = scalar_select %p35, 0, %s34
      %s37 = ssub.s32 %s24, %s36
      %s38 = ssub.s32 %s25, %s32
      %s39 = sor.u32 %s37, %s38
      %p40 = scmp.eq.s32.totalorder %s39, 0
      %s42 = sadd.s32 %s41, 1
      %s43 = scalar_select %p40, %s41, %s42
      %p46 = pneg %p40
      %p47 = scmp.eq.s32.totalorder %s17, 1
      %p48 = por %p46, %p47
      %p49 = scmp.ne.s32.totalorder %s41, %s44
      %p50 = scmp.eq.s32.totalorder %s17, 0
      %p51 = por %p49, %p50
      %p52 = scmp.ne.s32.totalorder %s41, %s44
      %p53 = scmp.eq.s32.totalorder %s22, 1
      %p54 = por %p52, %p53
      %p55 = scmp.ne.s32.totalorder %s44, %s45
      %p56 = scmp.eq.s32.totalorder %s22, 0
      %p57 = por %p55, %p56
      %p58 = scmp.ne.s32.totalorder %s44, %s45
      %p59 = scmp.eq.s32.totalorder %s23, 1
      %p60 = por %p58, %p59
      %p62 = scmp.ne.s32.totalorder %s45, %s61
      %p63 = scmp.eq.s32.totalorder %s23, 0
      %p64 = por %p62, %p63
      %s65 = ssub.s32 %s24, %s36
      %s66 = ssub.s32 %s25, %s32
      %s67 = sor.u32 %s65, %s66
      %p68 = scmp.eq.s32.totalorder %s67, 0
      %s70 = sadd.s32 %s69, 1
      %s71 = scalar_select %p68, %s69, %s70
      %p74 = pneg %p68
      %p75 = scmp.eq.s32.totalorder %s17, 1
      %p76 = por %p74, %p75
      %p77 = scmp.ne.s32.totalorder %s69, %s72
      %p78 = scmp.eq.s32.totalorder %s17, 0
      %p79 = por %p77, %p78
      %p80 = scmp.ne.s32.totalorder %s69, %s72
      %p81 = scmp.eq.s32.totalorder %s22, 1
      %p82 = por %p80, %p81
      %p83 = scmp.ne.s32.totalorder %s72, %s73
      %p84 = scmp.eq.s32.totalorder %s22, 0
      %p85 = por %p83, %p84
      %p86 = scmp.ne.s32.totalorder %s72, %s73
      %p87 = scmp.eq.s32.totalorder %s23, 1
      %p88 = por %p86, %p87
      %p90 = scmp.ne.s32.totalorder %s73, %s89
      %p91 = scmp.eq.s32.totalorder %s23, 0
      %p92 = por %p90, %p91
      %s93 = ssub.s32 %s24, %s36
      %s94 = ssub.s32 %s25, %s32
      %s95 = sor.u32 %s93, %s94
      %p96 = scmp.eq.s32.totalorder %s95, 0
      %s98 = sadd.s32 %s97, 1
      %s99 = scalar_select %p96, %s97, %s98
      %p102 = pneg %p96
      %p103 = scmp.eq.s32.totalorder %s17, 1
      %p104 = por %p102, %p103
      %p105 = scmp.ne.s32.totalorder %s97, %s100
      %p106 = scmp.eq.s32.totalorder %s17, 0
      %p107 = por %p105, %p106
      %p108 = scmp.ne.s32.totalorder %s97, %s100
      %p109 = scmp.eq.s32.totalorder %s22, 1
      %p110 = por %p108, %p109
      %p111 = scmp.ne.s32.totalorder %s100, %s101
      %p112 = scmp.eq.s32.totalorder %s22, 0
      %p113 = por %p111, %p112
      %p114 = scmp.ne.s32.totalorder %s100, %s101
      %p115 = scmp.eq.s32.totalorder %s23, 1
      %p116 = por %p114, %p115
      %p118 = scmp.ne.s32.totalorder %s101, %s117
      %p119 = scmp.eq.s32.totalorder %s23, 0
      %p120 = por %p118, %p119
      %p121 = scmp.le.s32.totalorder 1, %s17
      %p122 = scmp.lt.s32.totalorder %s17, 3
      %p123 = pnand %p121, %p122
      %p124 = pneg %p123
      // Predicated region
      $region9: #{tpu_custom_call.1} parent=5 // pred_check
        _
      $region10: #{tpu_custom_call.1} parent=5 // pred_check_branch
        %126 = sbr.rel (%p123) target = $region12
      $region11: #{tpu_custom_call.1} parent=5 // pred_region
        %s127 = ssub.s32 %s17, 1
      $region12: #{tpu_custom_call.1} parent=5 // pred_fallthru
        _
      %p128 = scmp.lt.s32.totalorder %s17, 2
      // Predicated region
      $region13: #{tpu_custom_call.1} parent=5 // pred_check
        %p129 = pneg %p128
      $region14: #{tpu_custom_call.1} parent=5 // pred_check_branch
        %131 = sbr.rel (%p129) target = $region16
      $region15: #{tpu_custom_call.1} parent=5 // pred_region
        // Predicated region
        $region17: #{tpu_custom_call.1} parent=15 // pred_check
          %p132 = pneg %p51
        $region18: #{tpu_custom_call.1} parent=15 // pred_check_branch
          %134 = sbr.rel (%p132) target = $region20
        $region19: #{tpu_custom_call.1} parent=15 // pred_region
          %s135 = sand.u32 %s41, 1
          %s136 = scalar_lea.sflag [#allocation3], %s135
          %s137 = sand.u32 %s41, 1
          %s138 = smul.addr %s137, 192
          %s139 = scalar_lea.vmem [#allocation2], %s138
          %s140 = smul.u32 2, %s25
          %142 = vsyncadd %s136, 0
          %s143 = smul.addr %s24, 24
          %s144 = sadd.s32 %s140, %s143
          %s145 = smul.addr %s144, 8
          %s146 = scalar_lea.hbm %s0, %s145
          %s147 = sshll.u32 %s146, 4
          %s148 = int_to_ptr.hbm [resolvable:$true] %s147
          %s149 = sshll.u32 %s139, 4
          %s150 = int_to_ptr.vmem [resolvable:$true] %s149
          %155 = dma.hbm_to_vmem [thread:$0]  %s148, 3072, %s150, %s136, 128, 128, 8
        $region20: #{tpu_custom_call.1} parent=15 // pred_fallthru
          _
        // Predicated region
        $region21: #{tpu_custom_call.1} parent=15 // pred_check
          %p156 = pneg %p79
        $region22: #{tpu_custom_call.1} parent=15 // pred_check_branch
          %158 = sbr.rel (%p156) target = $region24
        $region23: #{tpu_custom_call.1} parent=15 // pred_region
          %s159 = sand.u32 %s69, 1
          %s160 = scalar_lea.sflag [#allocation6], %s159
          %s161 = sand.u32 %s69, 1
          %s162 = smul.addr %s161, 48
          %s163 = scalar_lea.vmem [#allocation5], %s162
          %s164 = smul.u32 2, %s25
          %166 = vsyncadd %s160, 0
          %s167 = smul.addr %s24, 6
          %s168 = sadd.s32 %s164, %s167
          %s169 = smul.addr %s168, 8
          %s170 = scalar_lea.hbm %s1, %s169
          %s171 = sshll.u32 %s170, 4
          %s172 = int_to_ptr.hbm [resolvable:$true] %s171
          %s173 = sshll.u32 %s163, 4
          %s174 = int_to_ptr.vmem [resolvable:$true] %s173
          %179 = dma.hbm_to_vmem [thread:$0]  %s172, 768, %s174, %s160, 128, 128, 8
        $region24: #{tpu_custom_call.1} parent=15 // pred_fallthru
          _
      $region16: #{tpu_custom_call.1} parent=5 // pred_fallthru
        _
      %p180 = scmp.le.s32.totalorder 1, %s17
      %p181 = scmp.lt.s32.totalorder %s17, 3
      %p182 = pnand %p180, %p181
      %p183 = pneg %p182
      // Predicated region
      $region25: #{tpu_custom_call.1} parent=5 // pred_check
        _
      $region26: #{tpu_custom_call.1} parent=5 // pred_check_branch
        %185 = sbr.rel (%p182) target = $region28
      $region27: #{tpu_custom_call.1} parent=5 // pred_region
        %s186 = ssub.s32 %s17, 1
        %s187 = sand.u32 %s44, 1
        %s188 = scalar_lea.sflag [#allocation3], %s187
        %s189 = sand.u32 %s44, 1
        %s190 = smul.addr %s189, 192
        %s191 = scalar_lea.vmem [#allocation2], %s190
        // Predicated region
        $region29: #{tpu_custom_call.1} parent=27 // pred_check
          %p192 = pneg %p57
        $region30: #{tpu_custom_call.1} parent=27 // pred_check_branch
          %194 = sbr.rel (%p192) target = $region32
        $region31: #{tpu_custom_call.1} parent=27 // pred_region
          %196 = dma.done %s188, 3072
        $region32: #{tpu_custom_call.1} parent=27 // pred_fallthru
          _
        %s197 = sand.u32 %s72, 1
        %s198 = scalar_lea.sflag [#allocation6], %s197
        %s199 = sand.u32 %s72, 1
        %s200 = smul.addr %s199, 48
        %s201 = scalar_lea.vmem [#allocation5], %s200
        // Predicated region
        $region33: #{tpu_custom_call.1} parent=27 // pred_check
          %p202 = pneg %p85
        $region34: #{tpu_custom_call.1} parent=27 // pred_check_branch
          %204 = sbr.rel (%p202) target = $region36
        $region35: #{tpu_custom_call.1} parent=27 // pred_region
          %206 = dma.done %s198, 768
        $region36: #{tpu_custom_call.1} parent=27 // pred_fallthru
          _
        %s207 = sand.u32 %s44, 1
        %s208 = scalar_lea.sflag [#allocation3], %s207
        %s209 = sand.u32 %s44, 1
        %s210 = smul.addr %s209, 192
        %s211 = scalar_lea.vmem [#allocation2], %s210
        %p212 = pneg %p57
        %p213 = pneg %p54
        %s214 = sand.u32 %s72, 1
        %s215 = scalar_lea.sflag [#allocation6], %s214
        %s216 = sand.u32 %s72, 1
        %s217 = smul.addr %s216, 48
        %s218 = scalar_lea.vmem [#allocation5], %s217
        %p219 = pneg %p85
        %p220 = pneg %p82
        %p221 = pneg %p113
        %p222 = pneg %p110
        %s223 = sand.u32 %s100, 1
        %s224 = scalar_lea.sflag [#allocation4], %s223
        %s225 = sand.u32 %s100, 1
        %s226 = smul.addr %s225, 48
        %s227 = scalar_lea.vmem [#allocation7], %s226
        %s228 = smul.u32 2, %s27
        %s229 = smul.u32 2, %s27
        %s230 = smul.u32 2, %s27
        %v231 = vld [vmem:[%s201] sm:$0xff]
        %v232 = vld [vmem:[%s201 + $0x8] sm:$0xff]
        %s233 = scalar_lea.vmem %s201, 16 [#allocation5]
        %v234 = vld [vmem:[%s233] sm:$0xff]
        %v235 = vld [vmem:[%s233 + $0x8] sm:$0xff]
        %s236 = scalar_lea.vmem %s201, 32 [#allocation5]
        %v237 = vld [vmem:[%s236] sm:$0xff]
        %v238 = vld [vmem:[%s236 + $0x8] sm:$0xff]
        %v239 = vld [vmem:[%s191] sm:$0xff]
        %v240 = vld [vmem:[%s191 + $0x8] sm:$0xff]
        %v241 = vmul.f32 %v231, %v239
        %v242 = vmul.f32 %v232, %v240
        %s243 = scalar_lea.vmem %s191, 16 [#allocation2]
        %v244 = vld [vmem:[%s243] sm:$0xff]
        %v245 = vld [vmem:[%s243 + $0x8] sm:$0xff]
        %v246 = vmul.f32 %v234, %v244
        %v247 = vmul.f32 %v235, %v245
        %v248 = vadd.f32 %v241, %v246
        %v249 = vadd.f32 %v242, %v247
        %s250 = scalar_lea.vmem %s191, 32 [#allocation2]
        %v251 = vld [vmem:[%s250] sm:$0xff]
        %v252 = vld [vmem:[%s250 + $0x8] sm:$0xff]
        %v253 = vmul.f32 %v237, %v251
        %v254 = vmul.f32 %v238, %v252
        %v255 = vadd.f32 %v248, %v253
        %v256 = vadd.f32 %v249, %v254
        %s257 = scalar_lea.vmem %s191, 144 [#allocation2]
        %v258 = vld [vmem:[%s257] sm:$0xff]
        %v259 = vld [vmem:[%s257 + $0x8] sm:$0xff]
        %v260 = vadd.f32 %v255, %v258
        %v261 = vadd.f32 %v256, %v259
        %vm262 = vcmask 130048
        %263 = vst.msk [vmem:[%s227] sm:$0xff] %vm262, %v260
        %264 = vst.msk [vmem:[%s227 + $0x8] sm:$0xff] %vm262, %v261
        %s265 = scalar_lea.vmem %s191, 48 [#allocation2]
        %v266 = vld [vmem:[%s265] sm:$0xff]
        %v267 = vld [vmem:[%s265 + $0x8] sm:$0xff]
        %v268 = vmul.f32 %v231, %v266
        %v269 = vmul.f32 %v232, %v267
        %s270 = scalar_lea.vmem %s191, 64 [#allocation2]
        %v271 = vld [vmem:[%s270] sm:$0xff]
        %v272 = vld [vmem:[%s270 + $0x8] sm:$0xff]
        %v273 = vmul.f32 %v234, %v271
        %v274 = vmul.f32 %v235, %v272
        %v275 = vadd.f32 %v268, %v273
        %v276 = vadd.f32 %v269, %v274
        %s277 = scalar_lea.vmem %s191, 80 [#allocation2]
        %v278 = vld [vmem:[%s277] sm:$0xff]
        %v279 = vld [vmem:[%s277 + $0x8] sm:$0xff]
        %v280 = vmul.f32 %v237, %v278
        %v281 = vmul.f32 %v238, %v279
        %v282 = vadd.f32 %v275, %v280
        %v283 = vadd.f32 %v276, %v281
        %s284 = scalar_lea.vmem %s191, 160 [#allocation2]
        %v285 = vld [vmem:[%s284] sm:$0xff]
        %v286 = vld [vmem:[%s284 + $0x8] sm:$0xff]
        %v287 = vadd.f32 %v282, %v285
        %v288 = vadd.f32 %v283, %v286
        %s289 = scalar_lea.vmem %s227, 16 [#allocation7]
        %290 = vst.msk [vmem:[%s289] sm:$0xff] %vm262, %v287
        %291 = vst.msk [vmem:[%s289 + $0x8] sm:$0xff] %vm262, %v288
        %s292 = scalar_lea.vmem %s191, 96 [#allocation2]
        %v293 = vld [vmem:[%s292] sm:$0xff]
        %v294 = vld [vmem:[%s292 + $0x8] sm:$0xff]
        %v295 = vmul.f32 %v231, %v293
        %v296 = vmul.f32 %v232, %v294
        %s297 = scalar_lea.vmem %s191, 112 [#allocation2]
        %v298 = vld [vmem:[%s297] sm:$0xff]
        %v299 = vld [vmem:[%s297 + $0x8] sm:$0xff]
        %v300 = vmul.f32 %v234, %v298
        %v301 = vmul.f32 %v235, %v299
        %v302 = vadd.f32 %v295, %v300
        %v303 = vadd.f32 %v296, %v301
        %s304 = scalar_lea.vmem %s191, 128 [#allocation2]
        %v305 = vld [vmem:[%s304] sm:$0xff]
        %v306 = vld [vmem:[%s304 + $0x8] sm:$0xff]
        %v307 = vmul.f32 %v237, %v305
        %v308 = vmul.f32 %v238, %v306
        %v309 = vadd.f32 %v302, %v307
        %v310 = vadd.f32 %v303, %v308
        %s311 = scalar_lea.vmem %s191, 176 [#allocation2]
        %v312 = vld [vmem:[%s311] sm:$0xff]
        %v313 = vld [vmem:[%s311 + $0x8] sm:$0xff]
        %v314 = vadd.f32 %v309, %v312
        %v315 = vadd.f32 %v310, %v313
        %s316 = scalar_lea.vmem %s227, 32 [#allocation7]
        %317 = vst.msk [vmem:[%s316] sm:$0xff] %vm262, %v314
        %318 = vst.msk [vmem:[%s316 + $0x8] sm:$0xff] %vm262, %v315
        %s319 = sand.u32 %s100, 1
        %s320 = scalar_lea.sflag [#allocation4], %s319
        %s321 = sand.u32 %s100, 1
        %s322 = smul.addr %s321, 48
        %s323 = scalar_lea.vmem [#allocation7], %s322
        // Predicated region
        $region37: #{tpu_custom_call.1} parent=27 // pred_check
          %p324 = pneg %p110
        $region38: #{tpu_custom_call.1} parent=27 // pred_check_branch
          %326 = sbr.rel (%p324) target = $region40
        $region39: #{tpu_custom_call.1} parent=27 // pred_region
          %s327 = smul.u32 2, %s27
          %329 = vsyncadd %s320, 0
          %s330 = smul.addr %s26, 6
          %s331 = sadd.s32 %s327, %s330
          %s332 = smul.addr %s331, 8
          %s333 = scalar_lea.hbm %s2, %s332
          %s334 = sshll.u32 %s323, 4
          %s335 = int_to_ptr.vmem [resolvable:$true] %s334
          %s336 = sshll.u32 %s333, 4
          %s337 = int_to_ptr.hbm [resolvable:$true] %s336
          %342 = dma.vmem_to_hbm [thread:$0]  %s335, 768, %s337, %s320, 128, 128, 8
        $region40: #{tpu_custom_call.1} parent=27 // pred_fallthru
          _
      $region28: #{tpu_custom_call.1} parent=5 // pred_fallthru
        _
      %p343 = scmp.le.s32.totalorder 2, %s17
      // Predicated region
      $region41: #{tpu_custom_call.1} parent=5 // pred_check
        %p344 = pneg %p343
      $region42: #{tpu_custom_call.1} parent=5 // pred_check_branch
        %346 = sbr.rel (%p344) target = $region44
      $region43: #{tpu_custom_call.1} parent=5 // pred_region
        %s347 = ssub.s32 %s17, 2
        // Predicated region
        $region45: #{tpu_custom_call.1} parent=43 // pred_check
          %p348 = pneg %p116
        $region46: #{tpu_custom_call.1} parent=43 // pred_check_branch
          %350 = sbr.rel (%p348) target = $region48
        $region47: #{tpu_custom_call.1} parent=43 // pred_region
          %s351 = sand.u32 %s101, 1
          %s352 = scalar_lea.sflag [#allocation4], %s351
          %s353 = sand.u32 %s101, 1
          %s354 = smul.addr %s353, 48
          %s355 = scalar_lea.vmem [#allocation7], %s354
          %357 = dma.done %s352, 768
        $region48: #{tpu_custom_call.1} parent=43 // pred_fallthru
          _
      $region44: #{tpu_custom_call.1} parent=5 // pred_fallthru
        _
    $region6: #{tpu_custom_call.1} parent=1 // loop_footer
      %s21 = sadd.s32 1, %s17
    $region7: #{tpu_custom_call.1} parent=1 // loop_footer_branch
      %16 = sbr.rel target = $region3
    $region8: #{tpu_custom_call.1} parent=1 // loop_exit
      _
    %358 = vsyncpa [#allocation3], 1
    %s359 = scalar_lea.sflag [#allocation3], 1
    %360 = vsyncpa %s359, 1
    %361 = vsyncpa [#allocation6], 1
    %s362 = scalar_lea.sflag [#allocation6], 1
    %363 = vsyncpa %s362, 1
    %364 = vsyncpa [#allocation4], 1
    %s365 = scalar_lea.sflag [#allocation4], 1
    %366 = vsyncpa %s365, 1

</llo_original>
